<compile_context>
chip_gen: v7x
topology: tpu7x:2x2x1
jax: 0.10.0
libtpu: 0.0.40
codegen_flags: <defaults>
</compile_context>

<pallas_src>
import functools

import jax
import jax.numpy as jnp
from jax import lax
from jax.experimental import pallas as pl
from jax.experimental.pallas import tpu as pltpu


LANE = 128                           # feature dims padded to full lane width
FUSED_A_BYTES = 32 * 1024 * 1024     # bf16 A_hat budget for the fused path (v7x-safe)
H_RESIDENT_BYTES = 8 * 1024 * 1024   # keep H panel VMEM-resident below this size
VMEM_LIMIT = 48 * 1024 * 1024        # <= v7x 64 MiB physical VMEM


def _round_up(a, b):
    return ((a + b - 1) // b) * b


def _pad2(x, rows, cols):
    r, c = x.shape
    return jnp.pad(x, ((0, rows - r), (0, cols - c)))


# --------------------------------------------------------------------------
# Fused kernel: all three layers in one call, A_hat resident in VMEM.
# --------------------------------------------------------------------------
def _gcn_fused_kernel(a_ref, x_ref, w1_ref, b1_ref, w2_ref, b2_ref,
                      w3_ref, b3_ref, o_ref):
    def layer(h_bf16, w_ref, b_ref, relu):
        # bf16 x bf16 aggregation on the MXU, f32 accumulation.
        agg = jnp.dot(a_ref[...], h_bf16, preferred_element_type=jnp.float32)
        # Dense transform: bf16 single-pass MXU matmul, f32 bias add.
        y = jnp.dot(agg.astype(jnp.bfloat16), w_ref[...],
                    preferred_element_type=jnp.float32) + b_ref[...]
        if relu:
            y = jnp.maximum(y, 0.0)
        return y

    h = layer(x_ref[...], w1_ref, b1_ref, True).astype(jnp.bfloat16)
    # dropout after relu layers: identity in eval mode.
    h = layer(h, w2_ref, b2_ref, True).astype(jnp.bfloat16)
    o_ref[...] = layer(h, w3_ref, b3_ref, False).astype(o_ref.dtype)


def _gcn_fused(a_hat, x, weights, biases, *, out_dtype):
    n_pad = a_hat.shape[0]
    d_out = weights[2].shape[1]
    vmem = pl.BlockSpec(memory_space=pltpu.MemorySpace.VMEM)
    return pl.pallas_call(
        _gcn_fused_kernel,
        out_shape=jax.ShapeDtypeStruct((n_pad, d_out), out_dtype),
        in_specs=[vmem] * 8,
        out_specs=vmem,
        compiler_params=pltpu.CompilerParams(vmem_limit_bytes=VMEM_LIMIT),
    )(a_hat, x, weights[0], biases[0], weights[1], biases[1],
      weights[2], biases[2])


# --------------------------------------------------------------------------
# Tiled per-layer kernel:  out[i] = act( (sum_k A[i,k] @ H[k]) @ W + b )
# --------------------------------------------------------------------------
def _gcn_layer_kernel(a_ref, h_ref, w_ref, b_ref, o_ref, acc_ref, *,
                      block_k, h_resident, apply_relu):
    k = pl.program_id(1)

    @pl.when(k == 0)
    def _():
        acc_ref[...] = jnp.zeros_like(acc_ref)

    if h_resident:
        start = pl.multiple_of(k * block_k, block_k)
        h_tile = h_ref[pl.ds(start, block_k), :]
    else:
        h_tile = h_ref[...]

    # bf16 x bf16 aggregation on the MXU, f32 accumulate.
    acc_ref[...] += jnp.dot(a_ref[...], h_tile,
                            preferred_element_type=jnp.float32)

    @pl.when(k == pl.num_programs(1) - 1)
    def _():
        y = jnp.dot(acc_ref[...].astype(jnp.bfloat16), w_ref[...],
                    preferred_element_type=jnp.float32) + b_ref[...]
        if apply_relu:
            y = jnp.maximum(y, 0.0)
        o_ref[...] = y.astype(o_ref.dtype)
        # dropout after relu layers: identity in eval mode.


def _gcn_layer_tiled(a_hat, h, w, b, *, apply_relu, out_dtype):
    """a_hat: [Np, Np] bf16, h: [Np, Din] bf16, w: [Din, Dout] bf16, b: [1, Dout] f32."""
    n_pad = a_hat.shape[0]
    d_in = h.shape[1]
    d_out = w.shape[1]

    # Row blocks: keep >= 2 so the "parallel" axis can shard across v7x's two TCs.
    block_i = 256 if n_pad >= 512 else max(128, n_pad // 2)
    # Reduction blocks: as large as divisibility allows (amortizes step overhead).
    if n_pad % 1024 == 0:
        block_k = 1024
    elif n_pad % 512 == 0:
        block_k = 512
    else:
        block_k = 256
    block_k = min(block_k, n_pad)

    h_resident = (n_pad * d_in * h.dtype.itemsize) <= H_RESIDENT_BYTES
    if h_resident:
        h_spec = pl.BlockSpec((n_pad, d_in), lambda i, k: (0, 0))   # fetched once
    else:
        h_spec = pl.BlockSpec((block_k, d_in), lambda i, k: (k, 0))

    grid = (n_pad // block_i, n_pad // block_k)
    kernel = functools.partial(_gcn_layer_kernel, block_k=block_k,
                               h_resident=h_resident, apply_relu=apply_relu)

    return pl.pallas_call(
        kernel,
        out_shape=jax.ShapeDtypeStruct((n_pad, d_out), out_dtype),
        grid_spec=pltpu.PrefetchScalarGridSpec(
            num_scalar_prefetch=0,
            grid=grid,
            in_specs=[
                pl.BlockSpec((block_i, block_k), lambda i, k: (i, k)),  # A_hat tile
                h_spec,                                                 # H panel
                pl.BlockSpec((d_in, d_out), lambda i, k: (0, 0)),       # W (resident)
                pl.BlockSpec((1, d_out), lambda i, k: (0, 0)),          # bias
            ],
            out_specs=pl.BlockSpec((block_i, d_out), lambda i, k: (i, 0)),
            scratch_shapes=[pltpu.VMEM((block_i, d_in), jnp.float32)],
        ),
        compiler_params=pltpu.CompilerParams(
            dimension_semantics=("parallel", "arbitrary"),
            vmem_limit_bytes=VMEM_LIMIT,
        ),
    )(a_hat, h, w, b)


# --------------------------------------------------------------------------
# Glue: dense GCN-normalized adjacency (mirrors gcn_norm + add_remaining_self_loops).
# Built with one-hot matmuls (no dense scatter); compute ONCE per graph and reuse.
# --------------------------------------------------------------------------
def normalized_adjacency(edge_index, num_nodes):
    src, dst = edge_index[0], edge_index[1]
    # add_remaining_self_loops drops existing self-loops and re-adds one per node;
    # duplicate edges are summed (same as PyG gcn_norm).
    keep = (src != dst).astype(jnp.float32)                          # [E]
    nodes = jnp.arange(num_nodes)
    dst_oh = (dst[:, None] == nodes[None, :]).astype(jnp.float32)    # [E, N]
    src_oh = (src[:, None] == nodes[None, :]).astype(jnp.float32)    # [E, N]
    deg = dst_oh.T @ keep + 1.0                                      # [N]
    dinv = lax.rsqrt(deg)
    wgt = keep * (src_oh @ dinv) * (dst_oh @ dinv)                   # per-edge weight
    a = (dst_oh * wgt[:, None]).T @ src_oh                           # A[dst, src] += w
    a = a + jnp.diag(dinv * dinv)                                    # self loops
    return a


# --------------------------------------------------------------------------
# Forward pass
# --------------------------------------------------------------------------
def my_gcn_forward(x, edge_index, params, *, a_hat=None, force_tiled=False):
    w1, b1, w2, b2, w3, b3 = params
    n = x.shape[0]
    out_c = w3.shape[1]

    d_in_p = _round_up(x.shape[1], LANE)
    d_h1_p = _round_up(w1.shape[1], LANE)
    d_h2_p = _round_up(w2.shape[1], LANE)
    d_out_p = _round_up(w3.shape[1], LANE)

    # Path / padding selection (adaptive so tiny graphs are not padded to 256).
    n_pad = _round_up(max(n, LANE), LANE)
    use_fused = (not force_tiled) and (2 * n_pad * n_pad <= FUSED_A_BYTES)
    if not use_fused:
        n_pad = _round_up(max(n, 256), 256)

    if a_hat is None:   # prefer precomputing once per graph and passing it in
        a_hat = normalized_adjacency(edge_index, n)
    a_pad = _pad2(a_hat, n_pad, n_pad).astype(jnp.bfloat16)

    h0 = _pad2(x, n_pad, d_in_p).astype(jnp.bfloat16)

    w1p = _pad2(w1, d_in_p, d_h1_p).astype(jnp.bfloat16)
    w2p = _pad2(w2, d_h1_p, d_h2_p).astype(jnp.bfloat16)
    w3p = _pad2(w3, d_h2_p, d_out_p).astype(jnp.bfloat16)
    b1p = _pad2(b1, 1, d_h1_p).astype(jnp.float32)
    b2p = _pad2(b2, 1, d_h2_p).astype(jnp.float32)
    b3p = _pad2(b3, 1, d_out_p).astype(jnp.float32)

    if use_fused:
        out = _gcn_fused(a_pad, h0, (w1p, w2p, w3p), (b1p, b2p, b3p),
                         out_dtype=jnp.float32)
    else:
        h = _gcn_layer_tiled(a_pad, h0, w1p, b1p, apply_relu=True,
                             out_dtype=jnp.bfloat16)
        h = _gcn_layer_tiled(a_pad, h, w2p, b2p, apply_relu=True,
                             out_dtype=jnp.bfloat16)
        out = _gcn_layer_tiled(a_pad, h, w3p, b3p, apply_relu=False,
                               out_dtype=jnp.float32)

    return out[:n, :out_c]


def init_params(key, in_channels, hidden_1, hidden_2, out_channels):
    """Deterministic glorot-style init; biases start at zero (as in GCNConv)."""
    def glorot(k, fan_in, fan_out):
        scale = jnp.sqrt(6.0 / (fan_in + fan_out))
        return jax.random.uniform(k, (fan_in, fan_out), jnp.float32, -scale, scale)

    k1, k2, k3 = jax.random.split(key, 3)
    w1 = glorot(k1, in_channels, hidden_1)
    b1 = jnp.zeros((1, hidden_1), jnp.float32)
    w2 = glorot(k2, hidden_1, hidden_2)
    b2 = jnp.zeros((1, hidden_2), jnp.float32)
    w3 = glorot(k3, hidden_2, out_channels)
    b3 = jnp.zeros((1, out_channels), jnp.float32)
    return (w1, b1, w2, b2, w3, b3)


# Pure-JAX reference mirroring the kernels' bf16 storage / f32 accumulation.
def _ref_forward(x, edge_index, params):
    w1, b1, w2, b2, w3, b3 = params
    n = x.shape[0]
    a = normalized_adjacency(edge_index, n).astype(jnp.bfloat16).astype(jnp.float32)

    def layer(h, w, b, relu):
        agg = (a @ h).astype(jnp.bfloat16).astype(jnp.float32)
        y = agg @ w.astype(jnp.bfloat16).astype(jnp.float32) + b
        return jnp.maximum(y, 0.0) if relu else y

    h = x.astype(jnp.bfloat16).astype(jnp.float32)
    h = layer(h, w1, b1, True).astype(jnp.bfloat16).astype(jnp.float32)
    h = layer(h, w2, b2, True).astype(jnp.bfloat16).astype(jnp.float32)
    return layer(h, w3, b3, False)


if __name__ == "__main__":
    key = jax.random.PRNGKey(0)
    kx, ke, kp, kx2, ke2 = jax.random.split(key, 5)

    # ---- Small graph (16 nodes, 8 feats, hidden 32/16, 4 classes): fused path ----
    N, IN_C, H1, H2, OUT_C, E = 16, 8, 32, 16, 4, 40
    x = jax.random.normal(kx, (N, IN_C), jnp.float32)
    edge_index = jax.random.randint(ke, (2, E), 0, N, jnp.int32)
    params = init_params(kp, IN_C, H1, H2, OUT_C)

    out = jax.block_until_ready(my_gcn_forward(x, edge_index, params))
    assert out.shape == (N, OUT_C)
    ref = _ref_forward(x, edge_index, params)
    err = float(jnp.max(jnp.abs(out - ref)))
    assert jnp.allclose(out, ref, atol=2e-2, rtol=2e-2), ("fused path", err)

    # ---- Medium graph: force the tiled per-layer path (multi-block grid) ----
    N2, E2 = 600, 3000
    x2 = jax.random.normal(kx2, (N2, IN_C), jnp.float32)
    edge_index2 = jax.random.randint(ke2, (2, E2), 0, N2, jnp.int32)

    out2 = jax.block_until_ready(
        my_gcn_forward(x2, edge_index2, params, force_tiled=True))
    assert out2.shape == (N2, OUT_C)
    ref2 = _ref_forward(x2, edge_index2, params)
    err2 = float(jnp.max(jnp.abs(out2 - ref2)))
    assert jnp.allclose(out2, ref2, atol=2e-2, rtol=2e-2), ("tiled path", err2)

    print("KERNEL_OK")
</pallas_src>

<mosaic_0001>
module attributes {stable_mosaic.version = 11 : i64} {
  func.func @_gcn_fused_kernel(%arg0: memref<128x128xbf16, #tpu.memory_space<vmem>>, %arg1: memref<128x128xbf16, #tpu.memory_space<vmem>>, %arg2: memref<128x128xbf16, #tpu.memory_space<vmem>>, %arg3: memref<1x128xf32, #tpu.memory_space<vmem>>, %arg4: memref<128x128xbf16, #tpu.memory_space<vmem>>, %arg5: memref<1x128xf32, #tpu.memory_space<vmem>>, %arg6: memref<128x128xbf16, #tpu.memory_space<vmem>>, %arg7: memref<1x128xf32, #tpu.memory_space<vmem>>, %arg8: memref<128x128xf32, #tpu.memory_space<vmem>>) attributes {dimension_semantics = [], scalar_prefetch = 0 : i64, scratch_operands = 0 : i64, tpu.core_type = #tpu.core_type<tc>} {
    %c0 = arith.constant 0 : index
    %c0_0 = arith.constant 0 : index
    %0 = vector.load %arg1[%c0, %c0_0] : memref<128x128xbf16, #tpu.memory_space<vmem>>, vector<128x128xbf16>
    %c0_1 = arith.constant 0 : index
    %c0_2 = arith.constant 0 : index
    %1 = vector.load %arg0[%c0_1, %c0_2] : memref<128x128xbf16, #tpu.memory_space<vmem>>, vector<128x128xbf16>
    %cst = arith.constant dense<0.000000e+00> : vector<128x128xf32>
    %2 = tpu.matmul %1, %0, %cst {dimension_numbers = #tpu.dot_dimension_numbers<[1], [0], [0], [1], [0, 0, 1, 1], [], []>} : vector<128x128xbf16>, vector<128x128xbf16>, vector<128x128xf32> -> vector<128x128xf32>
    %3 = arith.truncf %2 : vector<128x128xf32> to vector<128x128xbf16>
    %c0_3 = arith.constant 0 : index
    %c0_4 = arith.constant 0 : index
    %4 = vector.load %arg2[%c0_3, %c0_4] : memref<128x128xbf16, #tpu.memory_space<vmem>>, vector<128x128xbf16>
    %cst_5 = arith.constant dense<0.000000e+00> : vector<128x128xf32>
    %5 = tpu.matmul %3, %4, %cst_5 {dimension_numbers = #tpu.dot_dimension_numbers<[1], [0], [0], [1], [0, 0, 1, 1], [], []>} : vector<128x128xbf16>, vector<128x128xbf16>, vector<128x128xf32> -> vector<128x128xf32>
    %c0_6 = arith.constant 0 : index
    %c0_7 = arith.constant 0 : index
    %6 = vector.load %arg3[%c0_6, %c0_7] : memref<1x128xf32, #tpu.memory_space<vmem>>, vector<1x128xf32>
    %7 = vector.broadcast %6 : vector<1x128xf32> to vector<128x128xf32>
    %8 = arith.addf %5, %7 : vector<128x128xf32>
    %cst_8 = arith.constant 0.000000e+00 : f32
    %9 = vector.broadcast %cst_8 : f32 to vector<128x128xf32>
    %10 = arith.maximumf %8, %9 : vector<128x128xf32>
    %11 = arith.truncf %10 : vector<128x128xf32> to vector<128x128xbf16>
    %c0_9 = arith.constant 0 : index
    %c0_10 = arith.constant 0 : index
    %12 = vector.load %arg0[%c0_9, %c0_10] : memref<128x128xbf16, #tpu.memory_space<vmem>>, vector<128x128xbf16>
    %cst_11 = arith.constant dense<0.000000e+00> : vector<128x128xf32>
    %13 = tpu.matmul %12, %11, %cst_11 {dimension_numbers = #tpu.dot_dimension_numbers<[1], [0], [0], [1], [0, 0, 1, 1], [], []>} : vector<128x128xbf16>, vector<128x128xbf16>, vector<128x128xf32> -> vector<128x128xf32>
    %14 = arith.truncf %13 : vector<128x128xf32> to vector<128x128xbf16>
    %c0_12 = arith.constant 0 : index
    %c0_13 = arith.constant 0 : index
    %15 = vector.load %arg4[%c0_12, %c0_13] : memref<128x128xbf16, #tpu.memory_space<vmem>>, vector<128x128xbf16>
    %cst_14 = arith.constant dense<0.000000e+00> : vector<128x128xf32>
    %16 = tpu.matmul %14, %15, %cst_14 {dimension_numbers = #tpu.dot_dimension_numbers<[1], [0], [0], [1], [0, 0, 1, 1], [], []>} : vector<128x128xbf16>, vector<128x128xbf16>, vector<128x128xf32> -> vector<128x128xf32>
    %c0_15 = arith.constant 0 : index
    %c0_16 = arith.constant 0 : index
    %17 = vector.load %arg5[%c0_15, %c0_16] : memref<1x128xf32, #tpu.memory_space<vmem>>, vector<1x128xf32>
    %18 = vector.broadcast %17 : vector<1x128xf32> to vector<128x128xf32>
    %19 = arith.addf %16, %18 : vector<128x128xf32>
    %cst_17 = arith.constant 0.000000e+00 : f32
    %20 = vector.broadcast %cst_17 : f32 to vector<128x128xf32>
    %21 = arith.maximumf %19, %20 : vector<128x128xf32>
    %22 = arith.truncf %21 : vector<128x128xf32> to vector<128x128xbf16>
    %c0_18 = arith.constant 0 : index
    %c0_19 = arith.constant 0 : index
    %23 = vector.load %arg0[%c0_18, %c0_19] : memref<128x128xbf16, #tpu.memory_space<vmem>>, vector<128x128xbf16>
    %cst_20 = arith.constant dense<0.000000e+00> : vector<128x128xf32>
    %24 = tpu.matmul %23, %22, %cst_20 {dimension_numbers = #tpu.dot_dimension_numbers<[1], [0], [0], [1], [0, 0, 1, 1], [], []>} : vector<128x128xbf16>, vector<128x128xbf16>, vector<128x128xf32> -> vector<128x128xf32>
    %25 = arith.truncf %24 : vector<128x128xf32> to vector<128x128xbf16>
    %c0_21 = arith.constant 0 : index
    %c0_22 = arith.constant 0 : index
    %26 = vector.load %arg6[%c0_21, %c0_22] : memref<128x128xbf16, #tpu.memory_space<vmem>>, vector<128x128xbf16>
    %cst_23 = arith.constant dense<0.000000e+00> : vector<128x128xf32>
    %27 = tpu.matmul %25, %26, %cst_23 {dimension_numbers = #tpu.dot_dimension_numbers<[1], [0], [0], [1], [0, 0, 1, 1], [], []>} : vector<128x128xbf16>, vector<128x128xbf16>, vector<128x128xf32> -> vector<128x128xf32>
    %c0_24 = arith.constant 0 : index
    %c0_25 = arith.constant 0 : index
    %28 = vector.load %arg7[%c0_24, %c0_25] : memref<1x128xf32, #tpu.memory_space<vmem>>, vector<1x128xf32>
    %29 = vector.broadcast %28 : vector<1x128xf32> to vector<128x128xf32>
    %30 = arith.addf %27, %29 : vector<128x128xf32>
    %c0_26 = arith.constant 0 : index
    %c0_27 = arith.constant 0 : index
    %31 = vector.load %arg8[%c0_26, %c0_27] : memref<128x128xf32, #tpu.memory_space<vmem>>, vector<128x128xf32>
    tpu.vector_store %arg8[%c0_26, %c0_27], %30 {strides = array<i32>} : memref<128x128xf32, #tpu.memory_space<vmem>>, vector<128x128xf32>,
    return
  }
}

</mosaic_0001>

<llo_original>
// kernel: tpu_custom_call.1
$region0: #{tpu_custom_call.1}
  #allocation0 [shape = 'u32[]', space=smem, size = 0x4, offset = 0x4, fixed_abs, tag = 'smem constant byte address 0x4 - core index']
  #allocation1 [shape = 'u32[144,128]{1,0:T(1,128)}', space=vmem, size = 0x12000, scoped, tag = 'internal scratch']
  %s0 = inlined_call_operand.hbm [shape: bf16[128,128], index: 0, kind: input, shape index: {}]
  %s1 = inlined_call_operand.hbm [shape: bf16[128,128], index: 1, kind: input, shape index: {}]
  %s2 = inlined_call_operand.hbm [shape: bf16[128,128], index: 2, kind: input, shape index: {}]
  %s3 = inlined_call_operand.vmem [shape: f32[1,128], index: 3, kind: input, shape index: {}]
  %s4 = inlined_call_operand.hbm [shape: bf16[128,128], index: 4, kind: input, shape index: {}]
  %s5 = inlined_call_operand.vmem [shape: f32[1,128], index: 5, kind: input, shape index: {}]
  %s6 = inlined_call_operand.hbm [shape: bf16[128,128], index: 6, kind: input, shape index: {}]
  %s7 = inlined_call_operand.vmem [shape: f32[1,128], index: 7, kind: input, shape index: {}]
  %s8 = inlined_call_operand.hbm [shape: f32[128,128], index: 8, kind: output, shape index: {}]
  %s9 = sld [smem:[#allocation0]]
  $region62: #{tpu_custom_call.1} parent=0
    _
  %s11 = ssub.s32 1, %s9
  %s12 = scalar_select 0, %s11, %s9
  $region1: #{tpu_custom_call.1} parent=0
    #allocation2 [shape = 'u8[32768]{0}', space=vmem, size = 0x8000, scoped, tag = 'input window, operand 0, single buffered']
    #allocation3 [shape = 's32[1]{0}', space=sflag, size = 0x4, scoped, tag = 'scoped memory for tpu_custom_call.1']
    #allocation4 [shape = 's32[1]{0}', space=sflag, size = 0x4, scoped, tag = 'scoped memory for tpu_custom_call.1']
    #allocation5 [shape = 'u8[32768]{0}', space=vmem, size = 0x8000, scoped, tag = 'input window, operand 1, single buffered']
    #allocation6 [shape = 's32[1]{0}', space=sflag, size = 0x4, scoped, tag = 'scoped memory for tpu_custom_call.1']
    #allocation7 [shape = 'u8[32768]{0}', space=vmem, size = 0x8000, scoped, tag = 'input window, operand 2, single buffered']
    #allocation8 [shape = 'u8[32768]{0}', space=vmem, size = 0x8000, scoped, tag = 'input window, operand 4, single buffered']
    #allocation9 [shape = 's32[1]{0}', space=sflag, size = 0x4, scoped, tag = 'scoped memory for tpu_custom_call.1']
    #allocation10 [shape = 'u8[32768]{0}', space=vmem, size = 0x8000, scoped, tag = 'input window, operand 6, single buffered']
    #allocation11 [shape = 'u8[65536]{0}', space=vmem, size = 0x10000, scoped, tag = 'output window, operand 0, single buffered']
    %13 = vsyncpa [#allocation3], 0
    %14 = vsyncpa [#allocation6], 0
    %15 = vsyncpa [#allocation9], 0
    %16 = vsyncpa [#allocation4], 0
    // Predicated region
    $region2: #{tpu_custom_call.1} parent=1 // pred_check
      _
    $region3: #{tpu_custom_call.1} parent=1 // pred_check_branch
      %18 = sbr.rel (0) target = $region5
    $region4: #{tpu_custom_call.1} parent=1 // pred_region
      %s20 = ssub.s32 1024, 1024
      %21 = vsyncadd [#allocation3], %s20
      %s22 = sshll.u32 [#allocation2], 4
      %s23 = int_to_ptr.vmem [resolvable:$true] %s22
      %28 = dma.hbm_to_vmem [thread:$0]  %s0, 1024, %s23, [#allocation3], 64, 64, 4
    $region5: #{tpu_custom_call.1} parent=1 // pred_fallthru
      _
    // Predicated region
    $region6: #{tpu_custom_call.1} parent=1 // pred_check
      _
    $region7: #{tpu_custom_call.1} parent=1 // pred_check_branch
      %30 = sbr.rel (0) target = $region9
    $region8: #{tpu_custom_call.1} parent=1 // pred_region
      %s32 = ssub.s32 1024, 1024
      %33 = vsyncadd [#allocation6], %s32
      %s34 = sshll.u32 [#allocation5], 4
      %s35 = int_to_ptr.vmem [resolvable:$true] %s34
      %40 = dma.hbm_to_vmem [thread:$0]  %s1, 1024, %s35, [#allocation6], 64, 64, 4
    $region9: #{tpu_custom_call.1} parent=1 // pred_fallthru
      _
    // Predicated region
    $region10: #{tpu_custom_call.1} parent=1 // pred_check
      _
    $region11: #{tpu_custom_call.1} parent=1 // pred_check_branch
      %42 = sbr.rel (0) target = $region13
    $region12: #{tpu_custom_call.1} parent=1 // pred_region
      %s44 = ssub.s32 1024, 1024
      %45 = vsyncadd [#allocation6], %s44
      %s46 = sshll.u32 [#allocation7], 4
      %s47 = int_to_ptr.vmem [resolvable:$true] %s46
      %52 = dma.hbm_to_vmem [thread:$0]  %s2, 1024, %s47, [#allocation6], 64, 64, 4
    $region13: #{tpu_custom_call.1} parent=1 // pred_fallthru
      _
    // Predicated region
    $region14: #{tpu_custom_call.1} parent=1 // pred_check
      _
    $region15: #{tpu_custom_call.1} parent=1 // pred_check_branch
      %54 = sbr.rel (0) target = $region17
    $region16: #{tpu_custom_call.1} parent=1 // pred_region
      _
    $region17: #{tpu_custom_call.1} parent=1 // pred_fallthru
      _
    // Predicated region
    $region18: #{tpu_custom_call.1} parent=1 // pred_check
      _
    $region19: #{tpu_custom_call.1} parent=1 // pred_check_branch
      %56 = sbr.rel (0) target = $region21
    $region20: #{tpu_custom_call.1} parent=1 // pred_region
      %s58 = ssub.s32 1024, 1024
      %59 = vsyncadd [#allocation9], %s58
      %s60 = sshll.u32 [#allocation8], 4
      %s61 = int_to_ptr.vmem [resolvable:$true] %s60
      %66 = dma.hbm_to_vmem [thread:$0]  %s4, 1024, %s61, [#allocation9], 64, 64, 4
    $region21: #{tpu_custom_call.1} parent=1 // pred_fallthru
      _
    // Predicated region
    $region22: #{tpu_custom_call.1} parent=1 // pred_check
      _
    $region23: #{tpu_custom_call.1} parent=1 // pred_check_branch
      %68 = sbr.rel (0) target = $region25
    $region24: #{tpu_custom_call.1} parent=1 // pred_region
      _
    $region25: #{tpu_custom_call.1} parent=1 // pred_fallthru
      _
    // Predicated region
    $region26: #{tpu_custom_call.1} parent=1 // pred_check
      _
    $region27: #{tpu_custom_call.1} parent=1 // pred_check_branch
      %70 = sbr.rel (0) target = $region29
    $region28: #{tpu_custom_call.1} parent=1 // pred_region
      %s72 = ssub.s32 1024, 1024
      %73 = vsyncadd [#allocation9], %s72
      %s74 = sshll.u32 [#allocation10], 4
      %s75 = int_to_ptr.vmem [resolvable:$true] %s74
      %80 = dma.hbm_to_vmem [thread:$0]  %s6, 1024, %s75, [#allocation9], 64, 64, 4
    $region29: #{tpu_custom_call.1} parent=1 // pred_fallthru
      _
    // Predicated region
    $region30: #{tpu_custom_call.1} parent=1 // pred_check
      _
    $region31: #{tpu_custom_call.1} parent=1 // pred_check_branch
      %82 = sbr.rel (0) target = $region33
    $region32: #{tpu_custom_call.1} parent=1 // pred_region
      _
    $region33: #{tpu_custom_call.1} parent=1 // pred_fallthru
      _
    // Predicated region
    $region34: #{tpu_custom_call.1} parent=1 // pred_check
      _
    $region35: #{tpu_custom_call.1} parent=1 // pred_check_branch
      %84 = sbr.rel (0) target = $region37
    $region36: #{tpu_custom_call.1} parent=1 // pred_region
      %85 = dma.done [#allocation3], 1024
    $region37: #{tpu_custom_call.1} parent=1 // pred_fallthru
      _
    // Predicated region
    $region38: #{tpu_custom_call.1} parent=1 // pred_check
      _
    $region39: #{tpu_custom_call.1} parent=1 // pred_check_branch
      %87 = sbr.rel (0) target = $region41
    $region40: #{tpu_custom_call.1} parent=1 // pred_region
      %88 = dma.done [#allocation6], 1024
    $region41: #{tpu_custom_call.1} parent=1 // pred_fallthru
      _
    // Predicated region
    $region42: #{tpu_custom_call.1} parent=1 // pred_check
      _
    $region43: #{tpu_custom_call.1} parent=1 // pred_check_branch
      %90 = sbr.rel (0) target = $region45
    $region44: #{tpu_custom_call.1} parent=1 // pred_region
      %91 = dma.done [#allocation6], 1024
    $region45: #{tpu_custom_call.1} parent=1 // pred_fallthru
      _
    // Predicated region
    $region46: #{tpu_custom_call.1} parent=1 // pred_check
      _
    $region47: #{tpu_custom_call.1} parent=1 // pred_check_branch
      %93 = sbr.rel (0) target = $region49
    $region48: #{tpu_custom_call.1} parent=1 // pred_region
      %94 = dma.done [#allocation9], 1024
    $region49: #{tpu_custom_call.1} parent=1 // pred_fallthru
      _
    // Predicated region
    $region50: #{tpu_custom_call.1} parent=1 // pred_check
      _
    $region51: #{tpu_custom_call.1} parent=1 // pred_check_branch
      %96 = sbr.rel (0) target = $region53
    $region52: #{tpu_custom_call.1} parent=1 // pred_region
      %97 = dma.done [#allocation9], 1024
    $region53: #{tpu_custom_call.1} parent=1 // pred_fallthru
      _
    %v99 = vld [vmem:[#allocation5] sm:$0xf]
    %v100 = vld [vmem:[#allocation5 + $0x4] sm:$0xf]
    %v101 = vld [vmem:[#allocation5 + $0x8] sm:$0xf]
    %v102 = vld [vmem:[#allocation5 + $0xc] sm:$0xf]
    %v103 = vld [vmem:[#allocation5 + $0x10] sm:$0xf]
    %v104 = vld [vmem:[#allocation5 + $0x14] sm:$0xf]
    %v105 = vld [vmem:[#allocation5 + $0x18] sm:$0xf]
    %v106 = vld [vmem:[#allocation5 + $0x1c] sm:$0xf]
    %v107 = vld [vmem:[#allocation5 + $0x20] sm:$0xf]
    %v108 = vld [vmem:[#allocation5 + $0x24] sm:$0xf]
    %v109 = vld [vmem:[#allocation5 + $0x28] sm:$0xf]
    %v110 = vld [vmem:[#allocation5 + $0x2c] sm:$0xf]
    %v111 = vld [vmem:[#allocation5 + $0x30] sm:$0xf]
    %v112 = vld [vmem:[#allocation5 + $0x34] sm:$0xf]
    %v113 = vld [vmem:[#allocation5 + $0x38] sm:$0xf]
    %v114 = vld [vmem:[#allocation5 + $0x3c] sm:$0xf]
    %v115 = vld [vmem:[#allocation2] sm:$0xf]
    %v116 = vld [vmem:[#allocation2 + $0x4] sm:$0xf]
    %v117 = vld [vmem:[#allocation2 + $0x8] sm:$0xf]
    %v118 = vld [vmem:[#allocation2 + $0xc] sm:$0xf]
    %v119 = vld [vmem:[#allocation2 + $0x10] sm:$0xf]
    %v120 = vld [vmem:[#allocation2 + $0x14] sm:$0xf]
    %v121 = vld [vmem:[#allocation2 + $0x18] sm:$0xf]
    %v122 = vld [vmem:[#allocation2 + $0x1c] sm:$0xf]
    %v123 = vld [vmem:[#allocation2 + $0x20] sm:$0xf]
    %v124 = vld [vmem:[#allocation2 + $0x24] sm:$0xf]
    %v125 = vld [vmem:[#allocation2 + $0x28] sm:$0xf]
    %v126 = vld [vmem:[#allocation2 + $0x2c] sm:$0xf]
    %v127 = vld [vmem:[#allocation2 + $0x30] sm:$0xf]
    %v128 = vld [vmem:[#allocation2 + $0x34] sm:$0xf]
    %v129 = vld [vmem:[#allocation2 + $0x38] sm:$0xf]
    %v130 = vld [vmem:[#allocation2 + $0x3c] sm:$0xf]
    %v147 = vunpack.c.l.b16 %v115
    %v148 = vunpack.c.l.b16 %v116
    %v149 = vunpack.c.l.b16 %v117
    %v150 = vunpack.c.l.b16 %v118
    %v151 = vunpack.c.l.b16 %v119
    %v152 = vunpack.c.l.b16 %v120
    %v153 = vunpack.c.l.b16 %v121
    %v154 = vunpack.c.l.b16 %v122
    %v155 = vunpack.c.l.b16 %v123
    %v156 = vunpack.c.l.b16 %v124
    %v157 = vunpack.c.l.b16 %v125
    %v158 = vunpack.c.l.b16 %v126
    %v159 = vunpack.c.l.b16 %v127
    %v160 = vunpack.c.l.b16 %v128
    %v161 = vunpack.c.l.b16 %v129
    %v162 = vunpack.c.l.b16 %v130
    %v163 = vpack.c.b16 %v148, %v147
    %v164 = vpack.c.b16 %v150, %v149
    %v165 = vpack.c.b16 %v152, %v151
    %v166 = vpack.c.b16 %v154, %v153
    %v167 = vpack.c.b16 %v156, %v155
    %v168 = vpack.c.b16 %v158, %v157
    %v169 = vpack.c.b16 %v160, %v159
    %v170 = vpack.c.b16 %v162, %v161
    %v195 = vunpack.c.l.b16 %v99
    %v196 = vunpack.c.l.b16 %v100
    %v197 = vunpack.c.l.b16 %v101
    %v198 = vunpack.c.l.b16 %v102
    %v199 = vunpack.c.l.b16 %v103
    %v200 = vunpack.c.l.b16 %v104
    %v201 = vunpack.c.l.b16 %v105
    %v202 = vunpack.c.l.b16 %v106
    %v203 = vunpack.c.l.b16 %v107
    %v204 = vunpack.c.l.b16 %v108
    %v205 = vunpack.c.l.b16 %v109
    %v206 = vunpack.c.l.b16 %v110
    %v207 = vunpack.c.l.b16 %v111
    %v208 = vunpack.c.l.b16 %v112
    %v209 = vunpack.c.l.b16 %v113
    %v210 = vunpack.c.l.b16 %v114
    %v211 = vpack.c.b16 %v196, %v195
    %v212 = vpack.c.b16 %v198, %v197
    %v213 = vpack.c.b16 %v200, %v199
    %v214 = vpack.c.b16 %v202, %v201
    %v215 = vpack.c.b16 %v204, %v203
    %v216 = vpack.c.b16 %v206, %v205
    %v217 = vpack.c.b16 %v208, %v207
    %v218 = vpack.c.b16 %v210, %v209
    %227 = vmatprep.subr.bf16.mxu0 0
    %228 = vmatpush1.bf16.msra.mxu0 %v211
    %229 = vmatprep.subr.bf16.mxu0 0
    %230 = vmatpush1.bf16.msra.mxu0 %v212
    %231 = vmatprep.subr.bf16.mxu0 0
    %232 = vmatpush1.bf16.msra.mxu0 %v213
    %233 = vmatprep.subr.bf16.mxu0 0
    %234 = vmatpush1.bf16.msra.mxu0 %v214
    %235 = vmatprep.subr.bf16.mxu0 0
    %236 = vmatpush1.bf16.msra.mxu0 %v215
    %237 = vmatprep.subr.bf16.mxu0 0
    %238 = vmatpush1.bf16.msra.mxu0 %v216
    %239 = vmatprep.subr.bf16.mxu0 0
    %240 = vmatpush1.bf16.msra.mxu0 %v217
    %241 = vmatprep.subr.bf16.mxu0 0
    %242 = vmatpush1.bf16.msra.mxu0 %v218
    %243 = vmatprep.subr.bf16.mxu0 0
    %244 = vmatpush1.bf16.msra.mxu0 0
    %245 = vmatprep.subr.bf16.mxu0 0
    %246 = vmatpush1.bf16.msra.mxu0 0
    %247 = vmatprep.subr.bf16.mxu0 0
    %248 = vmatpush1.bf16.msra.mxu0 0
    %249 = vmatprep.subr.bf16.mxu0 0
    %250 = vmatpush1.bf16.msra.mxu0 0
    %251 = vmatprep.subr.bf16.mxu0 0
    %252 = vmatpush1.bf16.msra.mxu0 0
    %253 = vmatprep.subr.bf16.mxu0 0
    %254 = vmatpush1.bf16.msra.mxu0 0
    %255 = vmatprep.subr.bf16.mxu0 0
    %256 = vmatpush1.bf16.msra.mxu0 0
    %257 = vmatprep.subr.bf16.mxu0 0
    %258 = vmatpush1.bf16.msra.mxu0 0
    %259 = vmatprep.mubr.bf16.mxu0 0
    %260 = vmatmul.mubr.bf16.gmra.mrb[0].mxu0 %v163
    %v261 = vpop.f32.mrb[0].mxu0
    %v262 = vadd.f32 0.0, %v261
    %v263 = vpop.f32.mrb[0].mxu0
    %v264 = vpop.f32.mrb[0].mxu0
    %v265 = vadd.f32 0.0, %v264
    %v266 = vpop.f32.mrb[0].mxu0
    %267 = vmatprep.mubr.bf16.mxu0 0
    %268 = vmatmul.mubr.bf16.gmra.mrb[0].mxu0 %v164
    %v269 = vpop.f32.mrb[0].mxu0
    %v270 = vadd.f32 0.0, %v269
    %v271 = vpop.f32.mrb[0].mxu0
    %v272 = vpop.f32.mrb[0].mxu0
    %v273 = vadd.f32 0.0, %v272
    %v274 = vpop.f32.mrb[0].mxu0
    %275 = vmatprep.mubr.bf16.mxu0 0
    %276 = vmatmul.mubr.bf16.gmra.mrb[0].mxu0 %v165
    %v277 = vpop.f32.mrb[0].mxu0
    %v278 = vadd.f32 0.0, %v277
    %v279 = vpop.f32.mrb[0].mxu0
    %v280 = vpop.f32.mrb[0].mxu0
    %v281 = vadd.f32 0.0, %v280
    %v282 = vpop.f32.mrb[0].mxu0
    %283 = vmatprep.mubr.bf16.mxu0 0
    %284 = vmatmul.mubr.bf16.gmra.mrb[0].mxu0 %v166
    %v285 = vpop.f32.mrb[0].mxu0
    %v286 = vadd.f32 0.0, %v285
    %v287 = vpop.f32.mrb[0].mxu0
    %v288 = vpop.f32.mrb[0].mxu0
    %v289 = vadd.f32 0.0, %v288
    %v290 = vpop.f32.mrb[0].mxu0
    %291 = vmatprep.mubr.bf16.mxu0 0
    %292 = vmatmul.mubr.bf16.gmra.mrb[0].mxu0 %v167
    %v293 = vpop.f32.mrb[0].mxu0
    %v294 = vadd.f32 0.0, %v293
    %v295 = vpop.f32.mrb[0].mxu0
    %v296 = vpop.f32.mrb[0].mxu0
    %v297 = vadd.f32 0.0, %v296
    %v298 = vpop.f32.mrb[0].mxu0
    %299 = vmatprep.mubr.bf16.mxu0 0
    %300 = vmatmul.mubr.bf16.gmra.mrb[0].mxu0 %v168
    %v301 = vpop.f32.mrb[0].mxu0
    %v302 = vadd.f32 0.0, %v301
    %v303 = vpop.f32.mrb[0].mxu0
    %v304 = vpop.f32.mrb[0].mxu0
    %v305 = vadd.f32 0.0, %v304
    %v306 = vpop.f32.mrb[0].mxu0
    %307 = vmatprep.mubr.bf16.mxu0 0
    %308 = vmatmul.mubr.bf16.gmra.mrb[0].mxu0 %v169
    %v309 = vpop.f32.mrb[0].mxu0
    %v310 = vadd.f32 0.0, %v309
    %v311 = vpop.f32.mrb[0].mxu0
    %v312 = vpop.f32.mrb[0].mxu0
    %v313 = vadd.f32 0.0, %v312
    %v314 = vpop.f32.mrb[0].mxu0
    %315 = vmatprep.mubr.bf16.mxu0 0
    %316 = vmatmul.mubr.bf16.gmra.mrb[0].mxu0 %v170
    %v317 = vpop.f32.mrb[0].mxu0
    %v318 = vadd.f32 0.0, %v317
    %v319 = vpop.f32.mrb[0].mxu0
    %v320 = vpop.f32.mrb[0].mxu0
    %v321 = vadd.f32 0.0, %v320
    %v322 = vpop.f32.mrb[0].mxu0
    %323 = vdwg.mxu0
    %v324 = vpack.c.bf16 %v265, %v262
    %v325 = vpack.c.bf16 %v273, %v270
    %v326 = vpack.c.bf16 %v281, %v278
    %v327 = vpack.c.bf16 %v289, %v286
    %v328 = vpack.c.bf16 %v297, %v294
    %v329 = vpack.c.bf16 %v305, %v302
    %v330 = vpack.c.bf16 %v313, %v310
    %v331 = vpack.c.bf16 %v321, %v318
    %v332 = vld [vmem:[#allocation7] sm:$0xf]
    %v333 = vld [vmem:[#allocation7 + $0x4] sm:$0xf]
    %v334 = vld [vmem:[#allocation7 + $0x8] sm:$0xf]
    %v335 = vld [vmem:[#allocation7 + $0xc] sm:$0xf]
    %v336 = vld [vmem:[#allocation7 + $0x10] sm:$0xf]
    %v337 = vld [vmem:[#allocation7 + $0x14] sm:$0xf]
    %v338 = vld [vmem:[#allocation7 + $0x18] sm:$0xf]
    %v339 = vld [vmem:[#allocation7 + $0x1c] sm:$0xf]
    %v340 = vld [vmem:[#allocation7 + $0x20] sm:$0xf]
    %v341 = vld [vmem:[#allocation7 + $0x24] sm:$0xf]
    %v342 = vld [vmem:[#allocation7 + $0x28] sm:$0xf]
    %v343 = vld [vmem:[#allocation7 + $0x2c] sm:$0xf]
    %v344 = vld [vmem:[#allocation7 + $0x30] sm:$0xf]
    %v345 = vld [vmem:[#allocation7 + $0x34] sm:$0xf]
    %v346 = vld [vmem:[#allocation7 + $0x38] sm:$0xf]
    %v347 = vld [vmem:[#allocation7 + $0x3c] sm:$0xf]
    %v348 = vld [vmem:[%s3] sm:$0x1]
    %v350 = vlaneseq
    %v351 = vshrl.u32 %v350, 7
    %v352 = vsub.s32 0, %v351
    %v353 = vrot.slane %v348, %v352
    %v371 = vunpack.c.l.b16 %v332
    %v372 = vunpack.c.l.b16 %v333
    %v373 = vunpack.c.l.b16 %v334
    %v374 = vunpack.c.l.b16 %v335
    %v375 = vunpack.c.l.b16 %v336
    %v376 = vunpack.c.l.b16 %v337
    %v377 = vunpack.c.l.b16 %v338
    %v378 = vunpack.c.l.b16 %v339
    %v379 = vunpack.c.l.b16 %v340
    %v380 = vunpack.c.l.b16 %v341
    %v381 = vunpack.c.l.b16 %v342
    %v382 = vunpack.c.l.b16 %v343
    %v383 = vunpack.c.l.b16 %v344
    %v384 = vunpack.c.l.b16 %v345
    %v385 = vunpack.c.l.b16 %v346
    %v386 = vunpack.c.l.b16 %v347
    %v387 = vpack.c.b16 %v372, %v371
    %v388 = vpack.c.b16 %v374, %v373
    %v389 = vpack.c.b16 %v376, %v375
    %v390 = vpack.c.b16 %v378, %v377
    %v391 = vpack.c.b16 %v380, %v379
    %v392 = vpack.c.b16 %v382, %v381
    %v393 = vpack.c.b16 %v384, %v383
    %v394 = vpack.c.b16 %v386, %v385
    %403 = vmatprep.subr.bf16.mxu0 0
    %404 = vmatpush1.bf16.msra.mxu0 %v387
    %405 = vmatprep.subr.bf16.mxu0 0
    %406 = vmatpush1.bf16.msra.mxu0 %v388
    %407 = vmatprep.subr.bf16.mxu0 0
    %408 = vmatpush1.bf16.msra.mxu0 %v389
    %409 = vmatprep.subr.bf16.mxu0 0
    %410 = vmatpush1.bf16.msra.mxu0 %v390
    %411 = vmatprep.subr.bf16.mxu0 0
    %412 = vmatpush1.bf16.msra.mxu0 %v391
    %413 = vmatprep.subr.bf16.mxu0 0
    %414 = vmatpush1.bf16.msra.mxu0 %v392
    %415 = vmatprep.subr.bf16.mxu0 0
    %416 = vmatpush1.bf16.msra.mxu0 %v393
    %417 = vmatprep.subr.bf16.mxu0 0
    %418 = vmatpush1.bf16.msra.mxu0 %v394
    %419 = vmatprep.subr.bf16.mxu0 0
    %420 = vmatpush1.bf16.msra.mxu0 0
    %421 = vmatprep.subr.bf16.mxu0 0
    %422 = vmatpush1.bf16.msra.mxu0 0
    %423 = vmatprep.subr.bf16.mxu0 0
    %424 = vmatpush1.bf16.msra.mxu0 0
    %425 = vmatprep.subr.bf16.mxu0 0
    %426 = vmatpush1.bf16.msra.mxu0 0
    %427 = vmatprep.subr.bf16.mxu0 0
    %428 = vmatpush1.bf16.msra.mxu0 0
    %429 = vmatprep.subr.bf16.mxu0 0
    %430 = vmatpush1.bf16.msra.mxu0 0
    %431 = vmatprep.subr.bf16.mxu0 0
    %432 = vmatpush1.bf16.msra.mxu0 0
    %433 = vmatprep.subr.bf16.mxu0 0
    %434 = vmatpush1.bf16.msra.mxu0 0
    %435 = vmatprep.mubr.bf16.mxu0 0
    %436 = vmatmul.mubr.bf16.gmra.mrb[0].mxu0 %v324
    %v437 = vpop.f32.mrb[0].mxu0
    %v438 = vadd.f32 %v353, %v437
    %v439 = vpop.f32.mrb[0].mxu0
    %v440 = vpop.f32.mrb[0].mxu0
    %v441 = vadd.f32 %v353, %v440
    %v442 = vpop.f32.mrb[0].mxu0
    %443 = vmatprep.mubr.bf16.mxu0 0
    %444 = vmatmul.mubr.bf16.gmra.mrb[0].mxu0 %v325
    %v445 = vpop.f32.mrb[0].mxu0
    %v446 = vadd.f32 %v353, %v445
    %v447 = vpop.f32.mrb[0].mxu0
    %v448 = vpop.f32.mrb[0].mxu0
    %v449 = vadd.f32 %v353, %v448
    %v450 = vpop.f32.mrb[0].mxu0
    %451 = vmatprep.mubr.bf16.mxu0 0
    %452 = vmatmul.mubr.bf16.gmra.mrb[0].mxu0 %v326
    %v453 = vpop.f32.mrb[0].mxu0
    %v454 = vadd.f32 %v353, %v453
    %v455 = vpop.f32.mrb[0].mxu0
    %v456 = vpop.f32.mrb[0].mxu0
    %v457 = vadd.f32 %v353, %v456
    %v458 = vpop.f32.mrb[0].mxu0
    %459 = vmatprep.mubr.bf16.mxu0 0
    %460 = vmatmul.mubr.bf16.gmra.mrb[0].mxu0 %v327
    %v461 = vpop.f32.mrb[0].mxu0
    %v462 = vadd.f32 %v353, %v461
    %v463 = vpop.f32.mrb[0].mxu0
    %v464 = vpop.f32.mrb[0].mxu0
    %v465 = vadd.f32 %v353, %v464
    %v466 = vpop.f32.mrb[0].mxu0
    %467 = vmatprep.mubr.bf16.mxu0 0
    %468 = vmatmul.mubr.bf16.gmra.mrb[0].mxu0 %v328
    %v469 = vpop.f32.mrb[0].mxu0
    %v470 = vadd.f32 %v353, %v469
    %v471 = vpop.f32.mrb[0].mxu0
    %v472 = vpop.f32.mrb[0].mxu0
    %v473 = vadd.f32 %v353, %v472
    %v474 = vpop.f32.mrb[0].mxu0
    %475 = vmatprep.mubr.bf16.mxu0 0
    %476 = vmatmul.mubr.bf16.gmra.mrb[0].mxu0 %v329
    %v477 = vpop.f32.mrb[0].mxu0
    %v478 = vadd.f32 %v353, %v477
    %v479 = vpop.f32.mrb[0].mxu0
    %v480 = vpop.f32.mrb[0].mxu0
    %v481 = vadd.f32 %v353, %v480
    %v482 = vpop.f32.mrb[0].mxu0
    %483 = vmatprep.mubr.bf16.mxu0 0
    %484 = vmatmul.mubr.bf16.gmra.mrb[0].mxu0 %v330
    %v485 = vpop.f32.mrb[0].mxu0
    %v486 = vadd.f32 %v353, %v485
    %v487 = vpop.f32.mrb[0].mxu0
    %v488 = vpop.f32.mrb[0].mxu0
    %v489 = vadd.f32 %v353, %v488
    %v490 = vpop.f32.mrb[0].mxu0
    %491 = vmatprep.mubr.bf16.mxu0 0
    %492 = vmatmul.mubr.bf16.gmra.mrb[0].mxu0 %v331
    %v493 = vpop.f32.mrb[0].mxu0
    %v494 = vadd.f32 %v353, %v493
    %v495 = vpop.f32.mrb[0].mxu0
    %v496 = vpop.f32.mrb[0].mxu0
    %v497 = vadd.f32 %v353, %v496
    %v498 = vpop.f32.mrb[0].mxu0
    %499 = vdwg.mxu0
    %v500 = vmax.f32 %v438, 0.0
    %v501 = vmax.f32 %v441, 0.0
    %v502 = vmax.f32 %v446, 0.0
    %v503 = vmax.f32 %v449, 0.0
    %v504 = vmax.f32 %v454, 0.0
    %v505 = vmax.f32 %v457, 0.0
    %v506 = vmax.f32 %v462, 0.0
    %v507 = vmax.f32 %v465, 0.0
    %v508 = vmax.f32 %v470, 0.0
    %v509 = vmax.f32 %v473, 0.0
    %v510 = vmax.f32 %v478, 0.0
    %v511 = vmax.f32 %v481, 0.0
    %v512 = vmax.f32 %v486, 0.0
    %v513 = vmax.f32 %v489, 0.0
    %v514 = vmax.f32 %v494, 0.0
    %v515 = vmax.f32 %v497, 0.0
    %v516 = vpack.c.bf16 %v501, %v500
    %v517 = vpack.c.bf16 %v503, %v502
    %v518 = vpack.c.bf16 %v505, %v504
    %v519 = vpack.c.bf16 %v507, %v506
    %v520 = vpack.c.bf16 %v509, %v508
    %v521 = vpack.c.bf16 %v511, %v510
    %v522 = vpack.c.bf16 %v513, %v512
    %v523 = vpack.c.bf16 %v515, %v514
    %524 = vmatprep.subr.bf16.mxu0 0
    %525 = vmatpush1.bf16.msra.mxu0 %v516
    %526 = vmatprep.subr.bf16.mxu0 0
    %527 = vmatpush1.bf16.msra.mxu0 %v517
    %528 = vmatprep.subr.bf16.mxu0 0
    %529 = vmatpush1.bf16.msra.mxu0 %v518
    %530 = vmatprep.subr.bf16.mxu0 0
    %531 = vmatpush1.bf16.msra.mxu0 %v519
    %532 = vmatprep.subr.bf16.mxu0 0
    %533 = vmatpush1.bf16.msra.mxu0 %v520
    %534 = vmatprep.subr.bf16.mxu0 0
    %535 = vmatpush1.bf16.msra.mxu0 %v521
    %536 = vmatprep.subr.bf16.mxu0 0
    %537 = vmatpush1.bf16.msra.mxu0 %v522
    %538 = vmatprep.subr.bf16.mxu0 0
    %539 = vmatpush1.bf16.msra.mxu0 %v523
    %540 = vmatprep.subr.bf16.mxu0 0
    %541 = vmatpush1.bf16.msra.mxu0 0
    %542 = vmatprep.subr.bf16.mxu0 0
    %543 = vmatpush1.bf16.msra.mxu0 0
    %544 = vmatprep.subr.bf16.mxu0 0
    %545 = vmatpush1.bf16.msra.mxu0 0
    %546 = vmatprep.subr.bf16.mxu0 0
    %547 = vmatpush1.bf16.msra.mxu0 0
    %548 = vmatprep.subr.bf16.mxu0 0
    %549 = vmatpush1.bf16.msra.mxu0 0
    %550 = vmatprep.subr.bf16.mxu0 0
    %551 = vmatpush1.bf16.msra.mxu0 0
    %552 = vmatprep.subr.bf16.mxu0 0
    %553 = vmatpush1.bf16.msra.mxu0 0
    %554 = vmatprep.subr.bf16.mxu0 0
    %555 = vmatpush1.bf16.msra.mxu0 0
    %556 = vmatprep.mubr.bf16.mxu0 0
    %557 = vmatmul.mubr.bf16.gmra.mrb[0].mxu0 %v163
    %v558 = vpop.f32.mrb[0].mxu0
    %v559 = vadd.f32 0.0, %v558
    %v560 = vpop.f32.mrb[0].mxu0
    %v561 = vpop.f32.mrb[0].mxu0
    %v562 = vadd.f32 0.0, %v561
    %v563 = vpop.f32.mrb[0].mxu0
    %564 = vmatprep.mubr.bf16.mxu0 0
    %565 = vmatmul.mubr.bf16.gmra.mrb[0].mxu0 %v164
    %v566 = vpop.f32.mrb[0].mxu0
    %v567 = vadd.f32 0.0, %v566
    %v568 = vpop.f32.mrb[0].mxu0
    %v569 = vpop.f32.mrb[0].mxu0
    %v570 = vadd.f32 0.0, %v569
    %v571 = vpop.f32.mrb[0].mxu0
    %572 = vmatprep.mubr.bf16.mxu0 0
    %573 = vmatmul.mubr.bf16.gmra.mrb[0].mxu0 %v165
    %v574 = vpop.f32.mrb[0].mxu0
    %v575 = vadd.f32 0.0, %v574
    %v576 = vpop.f32.mrb[0].mxu0
    %v577 = vpop.f32.mrb[0].mxu0
    %v578 = vadd.f32 0.0, %v577
    %v579 = vpop.f32.mrb[0].mxu0
    %580 = vmatprep.mubr.bf16.mxu0 0
    %581 = vmatmul.mubr.bf16.gmra.mrb[0].mxu0 %v166
    %v582 = vpop.f32.mrb[0].mxu0
    %v583 = vadd.f32 0.0, %v582
    %v584 = vpop.f32.mrb[0].mxu0
    %v585 = vpop.f32.mrb[0].mxu0
    %v586 = vadd.f32 0.0, %v585
    %v587 = vpop.f32.mrb[0].mxu0
    %588 = vmatprep.mubr.bf16.mxu0 0
    %589 = vmatmul.mubr.bf16.gmra.mrb[0].mxu0 %v167
    %v590 = vpop.f32.mrb[0].mxu0
    %v591 = vadd.f32 0.0, %v590
    %v592 = vpop.f32.mrb[0].mxu0
    %v593 = vpop.f32.mrb[0].mxu0
    %v594 = vadd.f32 0.0, %v593
    %v595 = vpop.f32.mrb[0].mxu0
    %596 = vmatprep.mubr.bf16.mxu0 0
    %597 = vmatmul.mubr.bf16.gmra.mrb[0].mxu0 %v168
    %v598 = vpop.f32.mrb[0].mxu0
    %v599 = vadd.f32 0.0, %v598
    %v600 = vpop.f32.mrb[0].mxu0
    %v601 = vpop.f32.mrb[0].mxu0
    %v602 = vadd.f32 0.0, %v601
    %v603 = vpop.f32.mrb[0].mxu0
    %604 = vmatprep.mubr.bf16.mxu0 0
    %605 = vmatmul.mubr.bf16.gmra.mrb[0].mxu0 %v169
    %v606 = vpop.f32.mrb[0].mxu0
    %v607 = vadd.f32 0.0, %v606
    %v608 = vpop.f32.mrb[0].mxu0
    %v609 = vpop.f32.mrb[0].mxu0
    %v610 = vadd.f32 0.0, %v609
    %v611 = vpop.f32.mrb[0].mxu0
    %612 = vmatprep.mubr.bf16.mxu0 0
    %613 = vmatmul.mubr.bf16.gmra.mrb[0].mxu0 %v170
    %v614 = vpop.f32.mrb[0].mxu0
    %v615 = vadd.f32 0.0, %v614
    %v616 = vpop.f32.mrb[0].mxu0
    %v617 = vpop.f32.mrb[0].mxu0
    %v618 = vadd.f32 0.0, %v617
    %v619 = vpop.f32.mrb[0].mxu0
    %620 = vdwg.mxu0
    %v621 = vpack.c.bf16 %v562, %v559
    %v622 = vpack.c.bf16 %v570, %v567
    %v623 = vpack.c.bf16 %v578, %v575
    %v624 = vpack.c.bf16 %v586, %v583
    %v625 = vpack.c.bf16 %v594, %v591
    %v626 = vpack.c.bf16 %v602, %v599
    %v627 = vpack.c.bf16 %v610, %v607
    %v628 = vpack.c.bf16 %v618, %v615
    %v629 = vld [vmem:[#allocation8] sm:$0xf]
    %v630 = vld [vmem:[#allocation8 + $0x4] sm:$0xf]
    %v631 = vld [vmem:[#allocation8 + $0x8] sm:$0xf]
    %v632 = vld [vmem:[#allocation8 + $0xc] sm:$0xf]
    %v633 = vld [vmem:[#allocation8 + $0x10] sm:$0xf]
    %v634 = vld [vmem:[#allocation8 + $0x14] sm:$0xf]
    %v635 = vld [vmem:[#allocation8 + $0x18] sm:$0xf]
    %v636 = vld [vmem:[#allocation8 + $0x1c] sm:$0xf]
    %v637 = vld [vmem:[#allocation8 + $0x20] sm:$0xf]
    %v638 = vld [vmem:[#allocation8 + $0x24] sm:$0xf]
    %v639 = vld [vmem:[#allocation8 + $0x28] sm:$0xf]
    %v640 = vld [vmem:[#allocation8 + $0x2c] sm:$0xf]
    %v641 = vld [vmem:[#allocation8 + $0x30] sm:$0xf]
    %v642 = vld [vmem:[#allocation8 + $0x34] sm:$0xf]
    %v643 = vld [vmem:[#allocation8 + $0x38] sm:$0xf]
    %v644 = vld [vmem:[#allocation8 + $0x3c] sm:$0xf]
    %v645 = vld [vmem:[%s5] sm:$0x1]
    %v647 = vlaneseq
    %v648 = vshrl.u32 %v647, 7
    %v649 = vsub.s32 0, %v648
    %v650 = vrot.slane %v645, %v649
    %v668 = vunpack.c.l.b16 %v629
    %v669 = vunpack.c.l.b16 %v630
    %v670 = vunpack.c.l.b16 %v631
    %v671 = vunpack.c.l.b16 %v632
    %v672 = vunpack.c.l.b16 %v633
    %v673 = vunpack.c.l.b16 %v634
    %v674 = vunpack.c.l.b16 %v635
    %v675 = vunpack.c.l.b16 %v636
    %v676 = vunpack.c.l.b16 %v637
    %v677 = vunpack.c.l.b16 %v638
    %v678 = vunpack.c.l.b16 %v639
    %v679 = vunpack.c.l.b16 %v640
    %v680 = vunpack.c.l.b16 %v641
    %v681 = vunpack.c.l.b16 %v642
    %v682 = vunpack.c.l.b16 %v643
    %v683 = vunpack.c.l.b16 %v644
    %v684 = vpack.c.b16 %v669, %v668
    %v685 = vpack.c.b16 %v671, %v670
    %v686 = vpack.c.b16 %v673, %v672
    %v687 = vpack.c.b16 %v675, %v674
    %v688 = vpack.c.b16 %v677, %v676
    %v689 = vpack.c.b16 %v679, %v678
    %v690 = vpack.c.b16 %v681, %v680
    %v691 = vpack.c.b16 %v683, %v682
    %700 = vmatprep.subr.bf16.mxu0 0
    %701 = vmatpush1.bf16.msra.mxu0 %v684
    %702 = vmatprep.subr.bf16.mxu0 0
    %703 = vmatpush1.bf16.msra.mxu0 %v685
    %704 = vmatprep.subr.bf16.mxu0 0
    %705 = vmatpush1.bf16.msra.mxu0 %v686
    %706 = vmatprep.subr.bf16.mxu0 0
    %707 = vmatpush1.bf16.msra.mxu0 %v687
    %708 = vmatprep.subr.bf16.mxu0 0
    %709 = vmatpush1.bf16.msra.mxu0 %v688
    %710 = vmatprep.subr.bf16.mxu0 0
    %711 = vmatpush1.bf16.msra.mxu0 %v689
    %712 = vmatprep.subr.bf16.mxu0 0
    %713 = vmatpush1.bf16.msra.mxu0 %v690
    %714 = vmatprep.subr.bf16.mxu0 0
    %715 = vmatpush1.bf16.msra.mxu0 %v691
    %716 = vmatprep.subr.bf16.mxu0 0
    %717 = vmatpush1.bf16.msra.mxu0 0
    %718 = vmatprep.subr.bf16.mxu0 0
    %719 = vmatpush1.bf16.msra.mxu0 0
    %720 = vmatprep.subr.bf16.mxu0 0
    %721 = vmatpush1.bf16.msra.mxu0 0
    %722 = vmatprep.subr.bf16.mxu0 0
    %723 = vmatpush1.bf16.msra.mxu0 0
    %724 = vmatprep.subr.bf16.mxu0 0
    %725 = vmatpush1.bf16.msra.mxu0 0
    %726 = vmatprep.subr.bf16.mxu0 0
    %727 = vmatpush1.bf16.msra.mxu0 0
    %728 = vmatprep.subr.bf16.mxu0 0
    %729 = vmatpush1.bf16.msra.mxu0 0
    %730 = vmatprep.subr.bf16.mxu0 0
    %731 = vmatpush1.bf16.msra.mxu0 0
    %732 = vmatprep.mubr.bf16.mxu0 0
    %733 = vmatmul.mubr.bf16.gmra.mrb[0].mxu0 %v621
    %v734 = vpop.f32.mrb[0].mxu0
    %v735 = vadd.f32 %v650, %v734
    %v736 = vpop.f32.mrb[0].mxu0
    %v737 = vpop.f32.mrb[0].mxu0
    %v738 = vadd.f32 %v650, %v737
    %v739 = vpop.f32.mrb[0].mxu0
    %740 = vmatprep.mubr.bf16.mxu0 0
    %741 = vmatmul.mubr.bf16.gmra.mrb[0].mxu0 %v622
    %v742 = vpop.f32.mrb[0].mxu0
    %v743 = vadd.f32 %v650, %v742
    %v744 = vpop.f32.mrb[0].mxu0
    %v745 = vpop.f32.mrb[0].mxu0
    %v746 = vadd.f32 %v650, %v745
    %v747 = vpop.f32.mrb[0].mxu0
    %748 = vmatprep.mubr.bf16.mxu0 0
    %749 = vmatmul.mubr.bf16.gmra.mrb[0].mxu0 %v623
    %v750 = vpop.f32.mrb[0].mxu0
    %v751 = vadd.f32 %v650, %v750
    %v752 = vpop.f32.mrb[0].mxu0
    %v753 = vpop.f32.mrb[0].mxu0
    %v754 = vadd.f32 %v650, %v753
    %v755 = vpop.f32.mrb[0].mxu0
    %756 = vmatprep.mubr.bf16.mxu0 0
    %757 = vmatmul.mubr.bf16.gmra.mrb[0].mxu0 %v624
    %v758 = vpop.f32.mrb[0].mxu0
    %v759 = vadd.f32 %v650, %v758
    %v760 = vpop.f32.mrb[0].mxu0
    %v761 = vpop.f32.mrb[0].mxu0
    %v762 = vadd.f32 %v650, %v761
    %v763 = vpop.f32.mrb[0].mxu0
    %764 = vmatprep.mubr.bf16.mxu0 0
    %765 = vmatmul.mubr.bf16.gmra.mrb[0].mxu0 %v625
    %v766 = vpop.f32.mrb[0].mxu0
    %v767 = vadd.f32 %v650, %v766
    %v768 = vpop.f32.mrb[0].mxu0
    %v769 = vpop.f32.mrb[0].mxu0
    %v770 = vadd.f32 %v650, %v769
    %v771 = vpop.f32.mrb[0].mxu0
    %772 = vmatprep.mubr.bf16.mxu0 0
    %773 = vmatmul.mubr.bf16.gmra.mrb[0].mxu0 %v626
    %v774 = vpop.f32.mrb[0].mxu0
    %v775 = vadd.f32 %v650, %v774
    %v776 = vpop.f32.mrb[0].mxu0
    %v777 = vpop.f32.mrb[0].mxu0
    %v778 = vadd.f32 %v650, %v777
    %v779 = vpop.f32.mrb[0].mxu0
    %780 = vmatprep.mubr.bf16.mxu0 0
    %781 = vmatmul.mubr.bf16.gmra.mrb[0].mxu0 %v627
    %v782 = vpop.f32.mrb[0].mxu0
    %v783 = vadd.f32 %v650, %v782
    %v784 = vpop.f32.mrb[0].mxu0
    %v785 = vpop.f32.mrb[0].mxu0
    %v786 = vadd.f32 %v650, %v785
    %v787 = vpop.f32.mrb[0].mxu0
    %788 = vmatprep.mubr.bf16.mxu0 0
    %789 = vmatmul.mubr.bf16.gmra.mrb[0].mxu0 %v628
    %v790 = vpop.f32.mrb[0].mxu0
    %v791 = vadd.f32 %v650, %v790
    %v792 = vpop.f32.mrb[0].mxu0
    %v793 = vpop.f32.mrb[0].mxu0
    %v794 = vadd.f32 %v650, %v793
    %v795 = vpop.f32.mrb[0].mxu0
    %796 = vdwg.mxu0
    %v797 = vmax.f32 %v735, 0.0
    %v798 = vmax.f32 %v738, 0.0
    %v799 = vmax.f32 %v743, 0.0
    %v800 = vmax.f32 %v746, 0.0
    %v801 = vmax.f32 %v751, 0.0
    %v802 = vmax.f32 %v754, 0.0
    %v803 = vmax.f32 %v759, 0.0
    %v804 = vmax.f32 %v762, 0.0
    %v805 = vmax.f32 %v767, 0.0
    %v806 = vmax.f32 %v770, 0.0
    %v807 = vmax.f32 %v775, 0.0
    %v808 = vmax.f32 %v778, 0.0
    %v809 = vmax.f32 %v783, 0.0
    %v810 = vmax.f32 %v786, 0.0
    %v811 = vmax.f32 %v791, 0.0
    %v812 = vmax.f32 %v794, 0.0
    %v813 = vpack.c.bf16 %v798, %v797
    %v814 = vpack.c.bf16 %v800, %v799
    %v815 = vpack.c.bf16 %v802, %v801
    %v816 = vpack.c.bf16 %v804, %v803
    %v817 = vpack.c.bf16 %v806, %v805
    %v818 = vpack.c.bf16 %v808, %v807
    %v819 = vpack.c.bf16 %v810, %v809
    %v820 = vpack.c.bf16 %v812, %v811
    %821 = vmatprep.subr.bf16.mxu0 0
    %822 = vmatpush1.bf16.msra.mxu0 %v813
    %823 = vmatprep.subr.bf16.mxu0 0
    %824 = vmatpush1.bf16.msra.mxu0 %v814
    %825 = vmatprep.subr.bf16.mxu0 0
    %826 = vmatpush1.bf16.msra.mxu0 %v815
    %827 = vmatprep.subr.bf16.mxu0 0
    %828 = vmatpush1.bf16.msra.mxu0 %v816
    %829 = vmatprep.subr.bf16.mxu0 0
    %830 = vmatpush1.bf16.msra.mxu0 %v817
    %831 = vmatprep.subr.bf16.mxu0 0
    %832 = vmatpush1.bf16.msra.mxu0 %v818
    %833 = vmatprep.subr.bf16.mxu0 0
    %834 = vmatpush1.bf16.msra.mxu0 %v819
    %835 = vmatprep.subr.bf16.mxu0 0
    %836 = vmatpush1.bf16.msra.mxu0 %v820
    %837 = vmatprep.subr.bf16.mxu0 0
    %838 = vmatpush1.bf16.msra.mxu0 0
    %839 = vmatprep.subr.bf16.mxu0 0
    %840 = vmatpush1.bf16.msra.mxu0 0
    %841 = vmatprep.subr.bf16.mxu0 0
    %842 = vmatpush1.bf16.msra.mxu0 0
    %843 = vmatprep.subr.bf16.mxu0 0
    %844 = vmatpush1.bf16.msra.mxu0 0
    %845 = vmatprep.subr.bf16.mxu0 0
    %846 = vmatpush1.bf16.msra.mxu0 0
    %847 = vmatprep.subr.bf16.mxu0 0
    %848 = vmatpush1.bf16.msra.mxu0 0
    %849 = vmatprep.subr.bf16.mxu0 0
    %850 = vmatpush1.bf16.msra.mxu0 0
    %851 = vmatprep.subr.bf16.mxu0 0
    %852 = vmatpush1.bf16.msra.mxu0 0
    %853 = vmatprep.mubr.bf16.mxu0 0
    %854 = vmatmul.mubr.bf16.gmra.mrb[0].mxu0 %v163
    %v855 = vpop.f32.mrb[0].mxu0
    %v856 = vadd.f32 0.0, %v855
    %v857 = vpop.f32.mrb[0].mxu0
    %v858 = vpop.f32.mrb[0].mxu0
    %v859 = vadd.f32 0.0, %v858
    %v860 = vpop.f32.mrb[0].mxu0
    %861 = vmatprep.mubr.bf16.mxu0 0
    %862 = vmatmul.mubr.bf16.gmra.mrb[0].mxu0 %v164
    %v863 = vpop.f32.mrb[0].mxu0
    %v864 = vadd.f32 0.0, %v863
    %v865 = vpop.f32.mrb[0].mxu0
    %v866 = vpop.f32.mrb[0].mxu0
    %v867 = vadd.f32 0.0, %v866
    %v868 = vpop.f32.mrb[0].mxu0
    %869 = vmatprep.mubr.bf16.mxu0 0
    %870 = vmatmul.mubr.bf16.gmra.mrb[0].mxu0 %v165
    %v871 = vpop.f32.mrb[0].mxu0
    %v872 = vadd.f32 0.0, %v871
    %v873 = vpop.f32.mrb[0].mxu0
    %v874 = vpop.f32.mrb[0].mxu0
    %v875 = vadd.f32 0.0, %v874
    %v876 = vpop.f32.mrb[0].mxu0
    %877 = vmatprep.mubr.bf16.mxu0 0
    %878 = vmatmul.mubr.bf16.gmra.mrb[0].mxu0 %v166
    %v879 = vpop.f32.mrb[0].mxu0
    %v880 = vadd.f32 0.0, %v879
    %v881 = vpop.f32.mrb[0].mxu0
    %v882 = vpop.f32.mrb[0].mxu0
    %v883 = vadd.f32 0.0, %v882
    %v884 = vpop.f32.mrb[0].mxu0
    %885 = vmatprep.mubr.bf16.mxu0 0
    %886 = vmatmul.mubr.bf16.gmra.mrb[0].mxu0 %v167
    %v887 = vpop.f32.mrb[0].mxu0
    %v888 = vadd.f32 0.0, %v887
    %v889 = vpop.f32.mrb[0].mxu0
    %v890 = vpop.f32.mrb[0].mxu0
    %v891 = vadd.f32 0.0, %v890
    %v892 = vpop.f32.mrb[0].mxu0
    %893 = vmatprep.mubr.bf16.mxu0 0
    %894 = vmatmul.mubr.bf16.gmra.mrb[0].mxu0 %v168
    %v895 = vpop.f32.mrb[0].mxu0
    %v896 = vadd.f32 0.0, %v895
    %v897 = vpop.f32.mrb[0].mxu0
    %v898 = vpop.f32.mrb[0].mxu0
    %v899 = vadd.f32 0.0, %v898
    %v900 = vpop.f32.mrb[0].mxu0
    %901 = vmatprep.mubr.bf16.mxu0 0
    %902 = vmatmul.mubr.bf16.gmra.mrb[0].mxu0 %v169
    %v903 = vpop.f32.mrb[0].mxu0
    %v904 = vadd.f32 0.0, %v903
    %v905 = vpop.f32.mrb[0].mxu0
    %v906 = vpop.f32.mrb[0].mxu0
    %v907 = vadd.f32 0.0, %v906
    %v908 = vpop.f32.mrb[0].mxu0
    %909 = vmatprep.mubr.bf16.mxu0 0
    %910 = vmatmul.mubr.bf16.gmra.mrb[0].mxu0 %v170
    %v911 = vpop.f32.mrb[0].mxu0
    %v912 = vadd.f32 0.0, %v911
    %v913 = vpop.f32.mrb[0].mxu0
    %v914 = vpop.f32.mrb[0].mxu0
    %v915 = vadd.f32 0.0, %v914
    %v916 = vpop.f32.mrb[0].mxu0
    %917 = vdwg.mxu0
    %v918 = vpack.c.bf16 %v859, %v856
    %v919 = vpack.c.bf16 %v867, %v864
    %v920 = vpack.c.bf16 %v875, %v872
    %v921 = vpack.c.bf16 %v883, %v880
    %v922 = vpack.c.bf16 %v891, %v888
    %v923 = vpack.c.bf16 %v899, %v896
    %v924 = vpack.c.bf16 %v907, %v904
    %v925 = vpack.c.bf16 %v915, %v912
    %v926 = vld [vmem:[#allocation10] sm:$0xf]
    %v927 = vld [vmem:[#allocation10 + $0x4] sm:$0xf]
    %v928 = vld [vmem:[#allocation10 + $0x8] sm:$0xf]
    %v929 = vld [vmem:[#allocation10 + $0xc] sm:$0xf]
    %v930 = vld [vmem:[#allocation10 + $0x10] sm:$0xf]
    %v931 = vld [vmem:[#allocation10 + $0x14] sm:$0xf]
    %v932 = vld [vmem:[#allocation10 + $0x18] sm:$0xf]
    %v933 = vld [vmem:[#allocation10 + $0x1c] sm:$0xf]
    %v934 = vld [vmem:[#allocation10 + $0x20] sm:$0xf]
    %v935 = vld [vmem:[#allocation10 + $0x24] sm:$0xf]
    %v936 = vld [vmem:[#allocation10 + $0x28] sm:$0xf]
    %v937 = vld [vmem:[#allocation10 + $0x2c] sm:$0xf]
    %v938 = vld [vmem:[#allocation10 + $0x30] sm:$0xf]
    %v939 = vld [vmem:[#allocation10 + $0x34] sm:$0xf]
    %v940 = vld [vmem:[#allocation10 + $0x38] sm:$0xf]
    %v941 = vld [vmem:[#allocation10 + $0x3c] sm:$0xf]
    %v942 = vld [vmem:[%s7] sm:$0x1]
    %v944 = vlaneseq
    %v945 = vshrl.u32 %v944, 7
    %v946 = vsub.s32 0, %v945
    %v947 = vrot.slane %v942, %v946
    %v965 = vunpack.c.l.b16 %v926
    %v966 = vunpack.c.l.b16 %v927
    %v967 = vunpack.c.l.b16 %v928
    %v968 = vunpack.c.l.b16 %v929
    %v969 = vunpack.c.l.b16 %v930
    %v970 = vunpack.c.l.b16 %v931
    %v971 = vunpack.c.l.b16 %v932
    %v972 = vunpack.c.l.b16 %v933
    %v973 = vunpack.c.l.b16 %v934
    %v974 = vunpack.c.l.b16 %v935
    %v975 = vunpack.c.l.b16 %v936
    %v976 = vunpack.c.l.b16 %v937
    %v977 = vunpack.c.l.b16 %v938
    %v978 = vunpack.c.l.b16 %v939
    %v979 = vunpack.c.l.b16 %v940
    %v980 = vunpack.c.l.b16 %v941
    %v981 = vpack.c.b16 %v966, %v965
    %v982 = vpack.c.b16 %v968, %v967
    %v983 = vpack.c.b16 %v970, %v969
    %v984 = vpack.c.b16 %v972, %v971
    %v985 = vpack.c.b16 %v974, %v973
    %v986 = vpack.c.b16 %v976, %v975
    %v987 = vpack.c.b16 %v978, %v977
    %v988 = vpack.c.b16 %v980, %v979
    %997 = vmatprep.subr.bf16.mxu0 0
    %998 = vmatpush1.bf16.msra.mxu0 %v981
    %999 = vmatprep.subr.bf16.mxu0 0
    %1000 = vmatpush1.bf16.msra.mxu0 %v982
    %1001 = vmatprep.subr.bf16.mxu0 0
    %1002 = vmatpush1.bf16.msra.mxu0 %v983
    %1003 = vmatprep.subr.bf16.mxu0 0
    %1004 = vmatpush1.bf16.msra.mxu0 %v984
    %1005 = vmatprep.subr.bf16.mxu0 0
    %1006 = vmatpush1.bf16.msra.mxu0 %v985
    %1007 = vmatprep.subr.bf16.mxu0 0
    %1008 = vmatpush1.bf16.msra.mxu0 %v986
    %1009 = vmatprep.subr.bf16.mxu0 0
    %1010 = vmatpush1.bf16.msra.mxu0 %v987
    %1011 = vmatprep.subr.bf16.mxu0 0
    %1012 = vmatpush1.bf16.msra.mxu0 %v988
    %1013 = vmatprep.subr.bf16.mxu0 0
    %1014 = vmatpush1.bf16.msra.mxu0 0
    %1015 = vmatprep.subr.bf16.mxu0 0
    %1016 = vmatpush1.bf16.msra.mxu0 0
    %1017 = vmatprep.subr.bf16.mxu0 0
    %1018 = vmatpush1.bf16.msra.mxu0 0
    %1019 = vmatprep.subr.bf16.mxu0 0
    %1020 = vmatpush1.bf16.msra.mxu0 0
    %1021 = vmatprep.subr.bf16.mxu0 0
    %1022 = vmatpush1.bf16.msra.mxu0 0
    %1023 = vmatprep.subr.bf16.mxu0 0
    %1024 = vmatpush1.bf16.msra.mxu0 0
    %1025 = vmatprep.subr.bf16.mxu0 0
    %1026 = vmatpush1.bf16.msra.mxu0 0
    %1027 = vmatprep.subr.bf16.mxu0 0
    %1028 = vmatpush1.bf16.msra.mxu0 0
    %1029 = vmatprep.mubr.bf16.mxu0 0
    %1030 = vmatmul.mubr.bf16.gmra.mrb[0].mxu0 %v918
    %v1031 = vpop.f32.mrb[0].mxu0
    %v1032 = vadd.f32 %v947, %v1031
    %v1033 = vpop.f32.mrb[0].mxu0
    %v1034 = vpop.f32.mrb[0].mxu0
    %v1035 = vadd.f32 %v947, %v1034
    %v1036 = vpop.f32.mrb[0].mxu0
    %1037 = vmatprep.mubr.bf16.mxu0 0
    %1038 = vmatmul.mubr.bf16.gmra.mrb[0].mxu0 %v919
    %v1039 = vpop.f32.mrb[0].mxu0
    %v1040 = vadd.f32 %v947, %v1039
    %v1041 = vpop.f32.mrb[0].mxu0
    %v1042 = vpop.f32.mrb[0].mxu0
    %v1043 = vadd.f32 %v947, %v1042
    %v1044 = vpop.f32.mrb[0].mxu0
    %1045 = vmatprep.mubr.bf16.mxu0 0
    %1046 = vmatmul.mubr.bf16.gmra.mrb[0].mxu0 %v920
    %v1047 = vpop.f32.mrb[0].mxu0
    %v1048 = vadd.f32 %v947, %v1047
    %v1049 = vpop.f32.mrb[0].mxu0
    %v1050 = vpop.f32.mrb[0].mxu0
    %v1051 = vadd.f32 %v947, %v1050
    %v1052 = vpop.f32.mrb[0].mxu0
    %1053 = vmatprep.mubr.bf16.mxu0 0
    %1054 = vmatmul.mubr.bf16.gmra.mrb[0].mxu0 %v921
    %v1055 = vpop.f32.mrb[0].mxu0
    %v1056 = vadd.f32 %v947, %v1055
    %v1057 = vpop.f32.mrb[0].mxu0
    %v1058 = vpop.f32.mrb[0].mxu0
    %v1059 = vadd.f32 %v947, %v1058
    %v1060 = vpop.f32.mrb[0].mxu0
    %1061 = vmatprep.mubr.bf16.mxu0 0
    %1062 = vmatmul.mubr.bf16.gmra.mrb[0].mxu0 %v922
    %v1063 = vpop.f32.mrb[0].mxu0
    %v1064 = vadd.f32 %v947, %v1063
    %v1065 = vpop.f32.mrb[0].mxu0
    %v1066 = vpop.f32.mrb[0].mxu0
    %v1067 = vadd.f32 %v947, %v1066
    %v1068 = vpop.f32.mrb[0].mxu0
    %1069 = vmatprep.mubr.bf16.mxu0 0
    %1070 = vmatmul.mubr.bf16.gmra.mrb[0].mxu0 %v923
    %v1071 = vpop.f32.mrb[0].mxu0
    %v1072 = vadd.f32 %v947, %v1071
    %v1073 = vpop.f32.mrb[0].mxu0
    %v1074 = vpop.f32.mrb[0].mxu0
    %v1075 = vadd.f32 %v947, %v1074
    %v1076 = vpop.f32.mrb[0].mxu0
    %1077 = vmatprep.mubr.bf16.mxu0 0
    %1078 = vmatmul.mubr.bf16.gmra.mrb[0].mxu0 %v924
    %v1079 = vpop.f32.mrb[0].mxu0
    %v1080 = vadd.f32 %v947, %v1079
    %v1081 = vpop.f32.mrb[0].mxu0
    %v1082 = vpop.f32.mrb[0].mxu0
    %v1083 = vadd.f32 %v947, %v1082
    %v1084 = vpop.f32.mrb[0].mxu0
    %1085 = vmatprep.mubr.bf16.mxu0 0
    %1086 = vmatmul.mubr.bf16.gmra.mrb[0].mxu0 %v925
    %v1087 = vpop.f32.mrb[0].mxu0
    %v1088 = vadd.f32 %v947, %v1087
    %v1089 = vpop.f32.mrb[0].mxu0
    %v1090 = vpop.f32.mrb[0].mxu0
    %v1091 = vadd.f32 %v947, %v1090
    %v1092 = vpop.f32.mrb[0].mxu0
    %1093 = vdwg.mxu0
    %1094 = vst [vmem:[#allocation11] sm:$0xff] %v1032
    %1095 = vst [vmem:[#allocation11 + $0x8] sm:$0xff] %v1035
    %1096 = vst [vmem:[#allocation11 + $0x10] sm:$0xff] %v1040
    %1097 = vst [vmem:[#allocation11 + $0x18] sm:$0xff] %v1043
    %1098 = vst [vmem:[#allocation11 + $0x20] sm:$0xff] %v1048
    %1099 = vst [vmem:[#allocation11 + $0x28] sm:$0xff] %v1051
    %1100 = vst [vmem:[#allocation11 + $0x30] sm:$0xff] %v1056
    %1101 = vst [vmem:[#allocation11 + $0x38] sm:$0xff] %v1059
    %1102 = vst [vmem:[#allocation11 + $0x40] sm:$0xff] %v1064
    %1103 = vst [vmem:[#allocation11 + $0x48] sm:$0xff] %v1067
    %1104 = vst [vmem:[#allocation11 + $0x50] sm:$0xff] %v1072
    %1105 = vst [vmem:[#allocation11 + $0x58] sm:$0xff] %v1075
    %1106 = vst [vmem:[#allocation11 + $0x60] sm:$0xff] %v1080
    %1107 = vst [vmem:[#allocation11 + $0x68] sm:$0xff] %v1083
    %1108 = vst [vmem:[#allocation11 + $0x70] sm:$0xff] %v1088
    %1109 = vst [vmem:[#allocation11 + $0x78] sm:$0xff] %v1091
    // Predicated region
    $region54: #{tpu_custom_call.1} parent=1 // pred_check
      _
    $region55: #{tpu_custom_call.1} parent=1 // pred_check_branch
      %1111 = sbr.rel (0) target = $region57
    $region56: #{tpu_custom_call.1} parent=1 // pred_region
      %s1113 = ssub.s32 2048, 2048
      %1114 = vsyncadd [#allocation4], %s1113
      %s1115 = sshll.u32 [#allocation11], 4
      %s1116 = int_to_ptr.vmem [resolvable:$true] %s1115
      %1121 = dma.vmem_to_hbm [thread:$0]  %s1116, 2048, %s8, [#allocation4], 128, 128, 8
    $region57: #{tpu_custom_call.1} parent=1 // pred_fallthru
      _
    // Predicated region
    $region58: #{tpu_custom_call.1} parent=1 // pred_check
      _
    $region59: #{tpu_custom_call.1} parent=1 // pred_check_branch
      %1123 = sbr.rel (0) target = $region61
    $region60: #{tpu_custom_call.1} parent=1 // pred_region
      %1124 = dma.done [#allocation4], 2048
    $region61: #{tpu_custom_call.1} parent=1 // pred_fallthru
      _
    %1125 = vsyncpa [#allocation3], 1
    %1126 = vsyncpa [#allocation6], 1
    %1127 = vsyncpa [#allocation9], 1
    %1128 = vsyncpa [#allocation4], 1

</llo_original>
